<compile_context>
chip_gen: v7x
topology: tpu7x:2x2x1
jax: 0.10.0
libtpu: 0.0.40
codegen_flags: <defaults>
</compile_context>

<pallas_src>
import functools

import jax
import jax.numpy as jnp
from jax.experimental import pallas as pl
from jax.experimental.pallas import tpu as pltpu

_LANE = 128


def _round_up(x, m):
    return ((x + m - 1) // m) * m


def _pad2(w, rows, cols):
    pr, pc = rows - w.shape[0], cols - w.shape[1]
    if pr or pc:
        w = jnp.pad(w, ((0, pr), (0, pc)))
    return w


def _pad1(b, n):
    p = n - b.shape[0]
    if p:
        b = jnp.pad(b, ((0, p),))
    return b


def _mlp_kernel(x_ref, w1_ref, b1_ref, w2_ref, b2_ref, w3_ref, b3_ref, o_ref):
    """Fused 3-layer MLP on one (lane-dense, padded) batch tile.

    Matmuls run on the MXU with f32 accumulation; bias add / ReLU stay in f32
    and activations are cast back to the weight dtype (bf16 or f32) between
    layers.
    """
    x = x_ref[...]
    h1 = jnp.dot(x, w1_ref[...], preferred_element_type=jnp.float32) + b1_ref[...]
    h1 = jnp.maximum(h1, 0.0).astype(w2_ref.dtype)
    h2 = jnp.dot(h1, w2_ref[...], preferred_element_type=jnp.float32) + b2_ref[...]
    h2 = jnp.maximum(h2, 0.0).astype(w3_ref.dtype)
    out = jnp.dot(h2, w3_ref[...], preferred_element_type=jnp.float32) + b3_ref[...]
    o_ref[...] = out.astype(o_ref.dtype)


@functools.partial(jax.jit, static_argnames=("block_b", "use_bf16"))
def state_encoder_forward(state, params, block_b=None, use_bf16=True):
    """state: (B, state_dim) float32.  params: dict of w1,b1,w2,b2,w3,b3."""
    B, state_dim = state.shape
    hidden_dim = params["w1"].shape[1]
    abstract_dim = params["w3"].shape[1]

    # ---- pad feature dims to lane multiples (zero padding is exact) ----------
    d_in = _round_up(state_dim, _LANE)
    d_hid = _round_up(hidden_dim, _LANE)
    d_out = _round_up(abstract_dim, _LANE)

    wdtype = jnp.bfloat16 if use_bf16 else jnp.float32
    w1 = _pad2(params["w1"], d_in, d_hid).astype(wdtype)
    w2 = _pad2(params["w2"], d_hid, d_hid).astype(wdtype)
    w3 = _pad2(params["w3"], d_hid, d_out).astype(wdtype)
    # biases stay f32 (added post-accumulation)
    b1 = _pad1(params["b1"], d_hid).reshape(1, d_hid).astype(jnp.float32)
    b2 = _pad1(params["b2"], d_hid).reshape(1, d_hid).astype(jnp.float32)
    b3 = _pad1(params["b3"], d_out).reshape(1, d_out).astype(jnp.float32)

    # ---- pick a large batch tile; pad B so any batch size works --------------
    if block_b is None:
        block_b = min(_round_up(B, 16), 512)   # whole batch in one step if small
    else:
        block_b = max(16, _round_up(block_b, 16))  # multiple of 16 for bf16 packing
    B_pad = _round_up(B, block_b)

    x = state.astype(wdtype)
    if B_pad != B or d_in != state_dim:
        x = jnp.pad(x, ((0, B_pad - B), (0, d_in - state_dim)))

    grid = (B_pad // block_b,)

    # Weights/biases use a constant index_map -> they stay resident in VMEM
    # across grid steps.  (If hidden_dim ever scales to ~2K+, additionally use
    # pipeline_mode=pl.Buffered(1) on these specs and raise vmem_limit_bytes,
    # especially on v7x's 64 MiB VMEM.)
    full = lambda arr: pl.BlockSpec(arr.shape, lambda i: (0, 0))

    flops = 2 * B_pad * (d_in * d_hid + d_hid * d_hid + d_hid * d_out)
    itemsize = 2 if use_bf16 else 4
    bytes_accessed = (
        B_pad * d_in * itemsize
        + (d_in * d_hid + d_hid * d_hid + d_hid * d_out) * itemsize
        + (2 * d_hid + d_out) * 4
        + B_pad * d_out * 4
    )

    out_padded = pl.pallas_call(
        _mlp_kernel,
        out_shape=jax.ShapeDtypeStruct((B_pad, d_out), jnp.float32),
        grid_spec=pl.GridSpec(
            grid=grid,
            in_specs=[
                pl.BlockSpec((block_b, d_in), lambda i: (i, 0)),
                full(w1), full(b1),
                full(w2), full(b2),
                full(w3), full(b3),
            ],
            out_specs=pl.BlockSpec((block_b, d_out), lambda i: (i, 0)),
        ),
        compiler_params=pltpu.CompilerParams(
            dimension_semantics=("parallel",),
        ),
        cost_estimate=pl.CostEstimate(
            flops=flops, transcendentals=0, bytes_accessed=bytes_accessed
        ),
    )(x, w1, b1, w2, b2, w3, b3)

    # strip batch / feature padding
    return out_padded[:B, :abstract_dim].astype(state.dtype)


def init_params(key, state_dim, abstract_state_dim, hidden_dim):
    """Deterministic synthetic init (stand-in for utils.weight_init)."""
    k1, k2, k3 = jax.random.split(key, 3)

    def linear(k, fan_in, fan_out):
        scale = 1.0 / jnp.sqrt(jnp.float32(fan_in))
        w = jax.random.normal(k, (fan_in, fan_out), jnp.float32) * scale
        b = jnp.zeros((fan_out,), jnp.float32)
        return w, b

    w1, b1 = linear(k1, state_dim, hidden_dim)
    w2, b2 = linear(k2, hidden_dim, hidden_dim)
    w3, b3 = linear(k3, hidden_dim, abstract_state_dim)
    return {"w1": w1, "b1": b1, "w2": w2, "b2": b2, "w3": w3, "b3": b3}


def _reference(state, p):
    h = jnp.maximum(state @ p["w1"] + p["b1"], 0.0)
    h = jnp.maximum(h @ p["w2"] + p["b2"], 0.0)
    return h @ p["w3"] + p["b3"]


if __name__ == "__main__":
    state_dim, abstract_state_dim, hidden_dim = 24, 16, 32
    batch = 16

    key = jax.random.PRNGKey(0)
    k_params, k_state = jax.random.split(key)
    params = init_params(k_params, state_dim, abstract_state_dim, hidden_dim)
    state = jax.random.normal(k_state, (batch, state_dim), jnp.float32)

    ref = _reference(state, params)

    # f32 path: bit-tight check of the kernel math.
    out_f32 = jax.block_until_ready(state_encoder_forward(state, params, use_bf16=False))
    assert out_f32.shape == (batch, abstract_state_dim)
    assert jnp.allclose(out_f32, ref, atol=1e-5, rtol=1e-5), "f32 mismatch vs reference"

    # bf16 path (default, fast on v6e/v7x MXU): looser tolerance.
    out_bf16 = jax.block_until_ready(state_encoder_forward(state, params))
    assert out_bf16.shape == (batch, abstract_state_dim)
    assert jnp.allclose(out_bf16, ref, atol=5e-2, rtol=5e-2), "bf16 mismatch vs reference"

    # Non-multiple batch + multi-step grid exercise (padding path).
    big_state = jax.random.normal(jax.random.PRNGKey(1), (300, state_dim), jnp.float32)
    big_ref = _reference(big_state, params)
    big_out = jax.block_until_ready(
        state_encoder_forward(big_state, params, block_b=128, use_bf16=False)
    )
    assert big_out.shape == (300, abstract_state_dim)
    assert jnp.allclose(big_out, big_ref, atol=1e-5, rtol=1e-5), "padded-batch mismatch"

    print("KERNEL_OK")
</pallas_src>

<mosaic_0001>
module attributes {stable_mosaic.version = 11 : i64} {
  func.func @_mlp_kernel(%arg0: i32, %arg1: memref<16x128xf32, #tpu.memory_space<vmem>>, %arg2: memref<128x128xf32, #tpu.memory_space<vmem>>, %arg3: memref<1x128xf32, #tpu.memory_space<vmem>>, %arg4: memref<128x128xf32, #tpu.memory_space<vmem>>, %arg5: memref<1x128xf32, #tpu.memory_space<vmem>>, %arg6: memref<128x128xf32, #tpu.memory_space<vmem>>, %arg7: memref<1x128xf32, #tpu.memory_space<vmem>>, %arg8: memref<16x128xf32, #tpu.memory_space<vmem>>) attributes {dimension_semantics = [#tpu.dimension_semantics<parallel>], iteration_bounds = array<i64: 1>, scalar_prefetch = 0 : i64, scratch_operands = 0 : i64, tpu.core_type = #tpu.core_type<tc>, window_params = [{transform_indices = @transform_0, window_bounds = array<i64: 16, 128>}, {pipeline_mode = #tpu.pipeline_mode<synchronous>, transform_indices = @transform_1, window_bounds = array<i64: 128, 128>}, {pipeline_mode = #tpu.pipeline_mode<synchronous>, transform_indices = @transform_2, window_bounds = array<i64: 1, 128>}, {pipeline_mode = #tpu.pipeline_mode<synchronous>, transform_indices = @transform_3, window_bounds = array<i64: 128, 128>}, {pipeline_mode = #tpu.pipeline_mode<synchronous>, transform_indices = @transform_4, window_bounds = array<i64: 1, 128>}, {pipeline_mode = #tpu.pipeline_mode<synchronous>, transform_indices = @transform_5, window_bounds = array<i64: 128, 128>}, {pipeline_mode = #tpu.pipeline_mode<synchronous>, transform_indices = @transform_6, window_bounds = array<i64: 1, 128>}, {transform_indices = @transform_7, window_bounds = array<i64: 16, 128>}]} {
    %c0 = arith.constant 0 : index
    %c0_0 = arith.constant 0 : index
    %0 = vector.load %arg1[%c0, %c0_0] : memref<16x128xf32, #tpu.memory_space<vmem>>, vector<16x128xf32>
    %c0_1 = arith.constant 0 : index
    %c0_2 = arith.constant 0 : index
    %1 = vector.load %arg2[%c0_1, %c0_2] : memref<128x128xf32, #tpu.memory_space<vmem>>, vector<128x128xf32>
    %cst = arith.constant dense<0.000000e+00> : vector<16x128xf32>
    %2 = tpu.matmul %0, %1, %cst {dimension_numbers = #tpu.dot_dimension_numbers<[1], [0], [0], [1], [0, 0, 1, 1], [], []>} : vector<16x128xf32>, vector<128x128xf32>, vector<16x128xf32> -> vector<16x128xf32>
    %c0_3 = arith.constant 0 : index
    %c0_4 = arith.constant 0 : index
    %3 = vector.load %arg3[%c0_3, %c0_4] : memref<1x128xf32, #tpu.memory_space<vmem>>, vector<1x128xf32>
    %4 = vector.broadcast %3 : vector<1x128xf32> to vector<16x128xf32>
    %5 = arith.addf %2, %4 : vector<16x128xf32>
    %cst_5 = arith.constant 0.000000e+00 : f32
    %6 = vector.broadcast %cst_5 : f32 to vector<16x128xf32>
    %7 = arith.maximumf %5, %6 : vector<16x128xf32>
    %c0_6 = arith.constant 0 : index
    %c0_7 = arith.constant 0 : index
    %8 = vector.load %arg4[%c0_6, %c0_7] : memref<128x128xf32, #tpu.memory_space<vmem>>, vector<128x128xf32>
    %cst_8 = arith.constant dense<0.000000e+00> : vector<16x128xf32>
    %9 = tpu.matmul %7, %8, %cst_8 {dimension_numbers = #tpu.dot_dimension_numbers<[1], [0], [0], [1], [0, 0, 1, 1], [], []>} : vector<16x128xf32>, vector<128x128xf32>, vector<16x128xf32> -> vector<16x128xf32>
    %c0_9 = arith.constant 0 : index
    %c0_10 = arith.constant 0 : index
    %10 = vector.load %arg5[%c0_9, %c0_10] : memref<1x128xf32, #tpu.memory_space<vmem>>, vector<1x128xf32>
    %11 = vector.broadcast %10 : vector<1x128xf32> to vector<16x128xf32>
    %12 = arith.addf %9, %11 : vector<16x128xf32>
    %cst_11 = arith.constant 0.000000e+00 : f32
    %13 = vector.broadcast %cst_11 : f32 to vector<16x128xf32>
    %14 = arith.maximumf %12, %13 : vector<16x128xf32>
    %c0_12 = arith.constant 0 : index
    %c0_13 = arith.constant 0 : index
    %15 = vector.load %arg6[%c0_12, %c0_13] : memref<128x128xf32, #tpu.memory_space<vmem>>, vector<128x128xf32>
    %cst_14 = arith.constant dense<0.000000e+00> : vector<16x128xf32>
    %16 = tpu.matmul %14, %15, %cst_14 {dimension_numbers = #tpu.dot_dimension_numbers<[1], [0], [0], [1], [0, 0, 1, 1], [], []>} : vector<16x128xf32>, vector<128x128xf32>, vector<16x128xf32> -> vector<16x128xf32>
    %c0_15 = arith.constant 0 : index
    %c0_16 = arith.constant 0 : index
    %17 = vector.load %arg7[%c0_15, %c0_16] : memref<1x128xf32, #tpu.memory_space<vmem>>, vector<1x128xf32>
    %18 = vector.broadcast %17 : vector<1x128xf32> to vector<16x128xf32>
    %19 = arith.addf %16, %18 : vector<16x128xf32>
    %c0_17 = arith.constant 0 : index
    %c0_18 = arith.constant 0 : index
    %20 = vector.load %arg8[%c0_17, %c0_18] : memref<16x128xf32, #tpu.memory_space<vmem>>, vector<16x128xf32>
    tpu.vector_store %arg8[%c0_17, %c0_18], %19 {strides = array<i32>} : memref<16x128xf32, #tpu.memory_space<vmem>>, vector<16x128xf32>,
    return
  }
  func.func @transform_0(%arg0: i32) -> (i32, i32) {
    %c0_i32 = arith.constant 0 : i32
    %c0_i32_0 = arith.constant 0 : i32
    return %arg0, %c0_i32 : i32, i32
  }
  func.func @transform_1(%arg0: i32) -> (i32, i32) {
    %c0_i32 = arith.constant 0 : i32
    %c0_i32_0 = arith.constant 0 : i32
    %c0_i32_1 = arith.constant 0 : i32
    return %c0_i32, %c0_i32_0 : i32, i32
  }
  func.func @transform_2(%arg0: i32) -> (i32, i32) {
    %c0_i32 = arith.constant 0 : i32
    %c0_i32_0 = arith.constant 0 : i32
    %c0_i32_1 = arith.constant 0 : i32
    return %c0_i32, %c0_i32_0 : i32, i32
  }
  func.func @transform_3(%arg0: i32) -> (i32, i32) {
    %c0_i32 = arith.constant 0 : i32
    %c0_i32_0 = arith.constant 0 : i32
    %c0_i32_1 = arith.constant 0 : i32
    return %c0_i32, %c0_i32_0 : i32, i32
  }
  func.func @transform_4(%arg0: i32) -> (i32, i32) {
    %c0_i32 = arith.constant 0 : i32
    %c0_i32_0 = arith.constant 0 : i32
    %c0_i32_1 = arith.constant 0 : i32
    return %c0_i32, %c0_i32_0 : i32, i32
  }
  func.func @transform_5(%arg0: i32) -> (i32, i32) {
    %c0_i32 = arith.constant 0 : i32
    %c0_i32_0 = arith.constant 0 : i32
    %c0_i32_1 = arith.constant 0 : i32
    return %c0_i32, %c0_i32_0 : i32, i32
  }
  func.func @transform_6(%arg0: i32) -> (i32, i32) {
    %c0_i32 = arith.constant 0 : i32
    %c0_i32_0 = arith.constant 0 : i32
    %c0_i32_1 = arith.constant 0 : i32
    return %c0_i32, %c0_i32_0 : i32, i32
  }
  func.func @transform_7(%arg0: i32) -> (i32, i32) {
    %c0_i32 = arith.constant 0 : i32
    %c0_i32_0 = arith.constant 0 : i32
    return %arg0, %c0_i32 : i32, i32
  }
}

</mosaic_0001>

<llo_original>
// kernel: state_encoder_forward.1
$region0: #{state_encoder_forward.1}
  #allocation0 [shape = 'u32[]', space=smem, size = 0x4, offset = 0x4, fixed_abs, tag = 'smem constant byte address 0x4 - core index']
  #allocation1 [shape = 'u32[144,128]{1,0:T(1,128)}', space=vmem, size = 0x12000, scoped, tag = 'internal scratch']
  %s0 = inlined_call_operand.vmem [shape: f32[16,128], index: 0, kind: input, shape index: {}]
  %s1 = inlined_call_operand.vmem [shape: f32[128,128], index: 1, kind: input, shape index: {}]
  %s2 = inlined_call_operand.vmem [shape: f32[1,128], index: 2, kind: input, shape index: {}]
  %s3 = inlined_call_operand.vmem [shape: f32[128,128], index: 3, kind: input, shape index: {}]
  %s4 = inlined_call_operand.vmem [shape: f32[1,128], index: 4, kind: input, shape index: {}]
  %s5 = inlined_call_operand.vmem [shape: f32[128,128], index: 5, kind: input, shape index: {}]
  %s6 = inlined_call_operand.vmem [shape: f32[1,128], index: 6, kind: input, shape index: {}]
  %s7 = inlined_call_operand.hbm [shape: f32[16,128], index: 7, kind: output, shape index: {}]
  %s8 = sld [smem:[#allocation0]]
  $region38: #{state_encoder_forward.1} parent=0
    _
  %s10 = ssub.s32 1, %s8
  %s11 = scalar_select 0, %s10, %s8
  $region1: #{state_encoder_forward.1} parent=0
    #allocation2 [shape = 'u8[8192]{0}', space=vmem, size = 0x2000, scoped, tag = 'output window, operand 0, single buffered']
    #allocation3 [shape = 's32[1]{0}', space=sflag, size = 0x4, scoped, tag = 'scoped memory for state_encoder_forward.1']
    %12 = vsyncpa [#allocation3], 0
    // Predicated region
    $region2: #{state_encoder_forward.1} parent=1 // pred_check
      _
    $region3: #{state_encoder_forward.1} parent=1 // pred_check_branch
      %14 = sbr.rel (0) target = $region5
    $region4: #{state_encoder_forward.1} parent=1 // pred_region
      _
    $region5: #{state_encoder_forward.1} parent=1 // pred_fallthru
      _
    // Predicated region
    $region6: #{state_encoder_forward.1} parent=1 // pred_check
      _
    $region7: #{state_encoder_forward.1} parent=1 // pred_check_branch
      %16 = sbr.rel (0) target = $region9
    $region8: #{state_encoder_forward.1} parent=1 // pred_region
      _
    $region9: #{state_encoder_forward.1} parent=1 // pred_fallthru
      _
    // Predicated region
    $region10: #{state_encoder_forward.1} parent=1 // pred_check
      _
    $region11: #{state_encoder_forward.1} parent=1 // pred_check_branch
      %18 = sbr.rel (0) target = $region13
    $region12: #{state_encoder_forward.1} parent=1 // pred_region
      _
    $region13: #{state_encoder_forward.1} parent=1 // pred_fallthru
      _
    // Predicated region
    $region14: #{state_encoder_forward.1} parent=1 // pred_check
      _
    $region15: #{state_encoder_forward.1} parent=1 // pred_check_branch
      %20 = sbr.rel (0) target = $region17
    $region16: #{state_encoder_forward.1} parent=1 // pred_region
      _
    $region17: #{state_encoder_forward.1} parent=1 // pred_fallthru
      _
    // Predicated region
    $region18: #{state_encoder_forward.1} parent=1 // pred_check
      _
    $region19: #{state_encoder_forward.1} parent=1 // pred_check_branch
      %22 = sbr.rel (0) target = $region21
    $region20: #{state_encoder_forward.1} parent=1 // pred_region
      _
    $region21: #{state_encoder_forward.1} parent=1 // pred_fallthru
      _
    // Predicated region
    $region22: #{state_encoder_forward.1} parent=1 // pred_check
      _
    $region23: #{state_encoder_forward.1} parent=1 // pred_check_branch
      %24 = sbr.rel (0) target = $region25
    $region24: #{state_encoder_forward.1} parent=1 // pred_region
      _
    $region25: #{state_encoder_forward.1} parent=1 // pred_fallthru
      _
    // Predicated region
    $region26: #{state_encoder_forward.1} parent=1 // pred_check
      _
    $region27: #{state_encoder_forward.1} parent=1 // pred_check_branch
      %26 = sbr.rel (0) target = $region29
    $region28: #{state_encoder_forward.1} parent=1 // pred_region
      _
    $region29: #{state_encoder_forward.1} parent=1 // pred_fallthru
      _
    %v27 = vld [vmem:[%s0] sm:$0xff]
    %v28 = vld [vmem:[%s0 + $0x8] sm:$0xff]
    %v29 = vld [vmem:[%s1] sm:$0xff]
    %v30 = vld [vmem:[%s1 + $0x8] sm:$0xff]
    %v31 = vld [vmem:[%s1 + $0x10] sm:$0xff]
    %v32 = vld [vmem:[%s1 + $0x18] sm:$0xff]
    %v33 = vld [vmem:[%s1 + $0x20] sm:$0xff]
    %v34 = vld [vmem:[%s1 + $0x28] sm:$0xff]
    %v35 = vld [vmem:[%s1 + $0x30] sm:$0xff]
    %v36 = vld [vmem:[%s1 + $0x38] sm:$0xff]
    %v37 = vld [vmem:[%s1 + $0x40] sm:$0xff]
    %v38 = vld [vmem:[%s1 + $0x48] sm:$0xff]
    %v39 = vld [vmem:[%s1 + $0x50] sm:$0xff]
    %v40 = vld [vmem:[%s1 + $0x58] sm:$0xff]
    %v41 = vld [vmem:[%s1 + $0x60] sm:$0xff]
    %v42 = vld [vmem:[%s1 + $0x68] sm:$0xff]
    %v43 = vld [vmem:[%s1 + $0x70] sm:$0xff]
    %v44 = vld [vmem:[%s1 + $0x78] sm:$0xff]
    %v45 = vld [vmem:[%s2] sm:$0x1]
    %v47 = vlaneseq
    %v48 = vshrl.u32 %v47, 7
    %v49 = vsub.s32 0, %v48
    %v50 = vrot.slane %v45, %v49
    %52 = vmatprep.subr.mxu0 0.0
    %53 = vmatpush1.msra.mxu0 %v29
    %54 = vmatprep.subr.mxu0 0.0
    %55 = vmatpush1.msra.mxu0 %v30
    %56 = vmatprep.subr.mxu0 0.0
    %57 = vmatpush1.msra.mxu0 %v31
    %58 = vmatprep.subr.mxu0 0.0
    %59 = vmatpush1.msra.mxu0 %v32
    %60 = vmatprep.subr.mxu0 0.0
    %61 = vmatpush1.msra.mxu0 %v33
    %62 = vmatprep.subr.mxu0 0.0
    %63 = vmatpush1.msra.mxu0 %v34
    %64 = vmatprep.subr.mxu0 0.0
    %65 = vmatpush1.msra.mxu0 %v35
    %66 = vmatprep.subr.mxu0 0.0
    %67 = vmatpush1.msra.mxu0 %v36
    %68 = vmatprep.subr.mxu0 0.0
    %69 = vmatpush1.msra.mxu0 %v37
    %70 = vmatprep.subr.mxu0 0.0
    %71 = vmatpush1.msra.mxu0 %v38
    %72 = vmatprep.subr.mxu0 0.0
    %73 = vmatpush1.msra.mxu0 %v39
    %74 = vmatprep.subr.mxu0 0.0
    %75 = vmatpush1.msra.mxu0 %v40
    %76 = vmatprep.subr.mxu0 0.0
    %77 = vmatpush1.msra.mxu0 %v41
    %78 = vmatprep.subr.mxu0 0.0
    %79 = vmatpush1.msra.mxu0 %v42
    %80 = vmatprep.subr.mxu0 0.0
    %81 = vmatpush1.msra.mxu0 %v43
    %82 = vmatprep.subr.mxu0 0.0
    %83 = vmatpush1.msra.mxu0 %v44
    %84 = vmatprep.subr.mxu0 0.0
    %85 = vmatpush1.msra.mxu0 0.0
    %86 = vmatprep.subr.mxu0 0.0
    %87 = vmatpush1.msra.mxu0 0.0
    %88 = vmatprep.subr.mxu0 0.0
    %89 = vmatpush1.msra.mxu0 0.0
    %90 = vmatprep.subr.mxu0 0.0
    %91 = vmatpush1.msra.mxu0 0.0
    %92 = vmatprep.subr.mxu0 0.0
    %93 = vmatpush1.msra.mxu0 0.0
    %94 = vmatprep.subr.mxu0 0.0
    %95 = vmatpush1.msra.mxu0 0.0
    %96 = vmatprep.subr.mxu0 0.0
    %97 = vmatpush1.msra.mxu0 0.0
    %98 = vmatprep.subr.mxu0 0.0
    %99 = vmatpush1.msra.mxu0 0.0
    %100 = vmatprep.subr.mxu0 0.0
    %101 = vmatpush1.msra.mxu0 0.0
    %102 = vmatprep.subr.mxu0 0.0
    %103 = vmatpush1.msra.mxu0 0.0
    %104 = vmatprep.subr.mxu0 0.0
    %105 = vmatpush1.msra.mxu0 0.0
    %106 = vmatprep.subr.mxu0 0.0
    %107 = vmatpush1.msra.mxu0 0.0
    %108 = vmatprep.subr.mxu0 0.0
    %109 = vmatpush1.msra.mxu0 0.0
    %110 = vmatprep.subr.mxu0 0.0
    %111 = vmatpush1.msra.mxu0 0.0
    %112 = vmatprep.subr.mxu0 0.0
    %113 = vmatpush1.msra.mxu0 0.0
    %114 = vmatprep.subr.mxu0 0.0
    %115 = vmatpush1.msra.mxu0 0.0
    %116 = vmatprep.mubr.f32.mxu0 0.0
    %117 = vmatmul.mubr.f32.gmra.mrb[0].mxu0 %v27
    %v118 = vpop.f32.mrb[0].mxu0
    %v119 = vadd.f32 %v50, %v118
    %v120 = vpop.f32.mrb[0].mxu0
    %121 = vmatprep.mubr.f32.mxu0 0.0
    %122 = vmatmul.mubr.f32.gmra.mrb[0].mxu0 %v28
    %v123 = vpop.f32.mrb[0].mxu0
    %v124 = vadd.f32 %v50, %v123
    %v125 = vpop.f32.mrb[0].mxu0
    %126 = vdwg.mxu0
    %v127 = vmax.f32 %v119, 0.0
    %v128 = vmax.f32 %v124, 0.0
    %v129 = vld [vmem:[%s3] sm:$0xff]
    %v130 = vld [vmem:[%s3 + $0x8] sm:$0xff]
    %v131 = vld [vmem:[%s3 + $0x10] sm:$0xff]
    %v132 = vld [vmem:[%s3 + $0x18] sm:$0xff]
    %v133 = vld [vmem:[%s3 + $0x20] sm:$0xff]
    %v134 = vld [vmem:[%s3 + $0x28] sm:$0xff]
    %v135 = vld [vmem:[%s3 + $0x30] sm:$0xff]
    %v136 = vld [vmem:[%s3 + $0x38] sm:$0xff]
    %v137 = vld [vmem:[%s3 + $0x40] sm:$0xff]
    %v138 = vld [vmem:[%s3 + $0x48] sm:$0xff]
    %v139 = vld [vmem:[%s3 + $0x50] sm:$0xff]
    %v140 = vld [vmem:[%s3 + $0x58] sm:$0xff]
    %v141 = vld [vmem:[%s3 + $0x60] sm:$0xff]
    %v142 = vld [vmem:[%s3 + $0x68] sm:$0xff]
    %v143 = vld [vmem:[%s3 + $0x70] sm:$0xff]
    %v144 = vld [vmem:[%s3 + $0x78] sm:$0xff]
    %v145 = vld [vmem:[%s4] sm:$0x1]
    %v147 = vlaneseq
    %v148 = vshrl.u32 %v147, 7
    %v149 = vsub.s32 0, %v148
    %v150 = vrot.slane %v145, %v149
    %152 = vmatprep.subr.mxu0 0.0
    %153 = vmatpush1.msra.mxu0 %v129
    %154 = vmatprep.subr.mxu0 0.0
    %155 = vmatpush1.msra.mxu0 %v130
    %156 = vmatprep.subr.mxu0 0.0
    %157 = vmatpush1.msra.mxu0 %v131
    %158 = vmatprep.subr.mxu0 0.0
    %159 = vmatpush1.msra.mxu0 %v132
    %160 = vmatprep.subr.mxu0 0.0
    %161 = vmatpush1.msra.mxu0 %v133
    %162 = vmatprep.subr.mxu0 0.0
    %163 = vmatpush1.msra.mxu0 %v134
    %164 = vmatprep.subr.mxu0 0.0
    %165 = vmatpush1.msra.mxu0 %v135
    %166 = vmatprep.subr.mxu0 0.0
    %167 = vmatpush1.msra.mxu0 %v136
    %168 = vmatprep.subr.mxu0 0.0
    %169 = vmatpush1.msra.mxu0 %v137
    %170 = vmatprep.subr.mxu0 0.0
    %171 = vmatpush1.msra.mxu0 %v138
    %172 = vmatprep.subr.mxu0 0.0
    %173 = vmatpush1.msra.mxu0 %v139
    %174 = vmatprep.subr.mxu0 0.0
    %175 = vmatpush1.msra.mxu0 %v140
    %176 = vmatprep.subr.mxu0 0.0
    %177 = vmatpush1.msra.mxu0 %v141
    %178 = vmatprep.subr.mxu0 0.0
    %179 = vmatpush1.msra.mxu0 %v142
    %180 = vmatprep.subr.mxu0 0.0
    %181 = vmatpush1.msra.mxu0 %v143
    %182 = vmatprep.subr.mxu0 0.0
    %183 = vmatpush1.msra.mxu0 %v144
    %184 = vmatprep.subr.mxu0 0.0
    %185 = vmatpush1.msra.mxu0 0.0
    %186 = vmatprep.subr.mxu0 0.0
    %187 = vmatpush1.msra.mxu0 0.0
    %188 = vmatprep.subr.mxu0 0.0
    %189 = vmatpush1.msra.mxu0 0.0
    %190 = vmatprep.subr.mxu0 0.0
    %191 = vmatpush1.msra.mxu0 0.0
    %192 = vmatprep.subr.mxu0 0.0
    %193 = vmatpush1.msra.mxu0 0.0
    %194 = vmatprep.subr.mxu0 0.0
    %195 = vmatpush1.msra.mxu0 0.0
    %196 = vmatprep.subr.mxu0 0.0
    %197 = vmatpush1.msra.mxu0 0.0
    %198 = vmatprep.subr.mxu0 0.0
    %199 = vmatpush1.msra.mxu0 0.0
    %200 = vmatprep.subr.mxu0 0.0
    %201 = vmatpush1.msra.mxu0 0.0
    %202 = vmatprep.subr.mxu0 0.0
    %203 = vmatpush1.msra.mxu0 0.0
    %204 = vmatprep.subr.mxu0 0.0
    %205 = vmatpush1.msra.mxu0 0.0
    %206 = vmatprep.subr.mxu0 0.0
    %207 = vmatpush1.msra.mxu0 0.0
    %208 = vmatprep.subr.mxu0 0.0
    %209 = vmatpush1.msra.mxu0 0.0
    %210 = vmatprep.subr.mxu0 0.0
    %211 = vmatpush1.msra.mxu0 0.0
    %212 = vmatprep.subr.mxu0 0.0
    %213 = vmatpush1.msra.mxu0 0.0
    %214 = vmatprep.subr.mxu0 0.0
    %215 = vmatpush1.msra.mxu0 0.0
    %216 = vmatprep.mubr.f32.mxu0 0.0
    %217 = vmatmul.mubr.f32.gmra.mrb[0].mxu0 %v127
    %v218 = vpop.f32.mrb[0].mxu0
    %v219 = vadd.f32 %v150, %v218
    %v220 = vpop.f32.mrb[0].mxu0
    %221 = vmatprep.mubr.f32.mxu0 0.0
    %222 = vmatmul.mubr.f32.gmra.mrb[0].mxu0 %v128
    %v223 = vpop.f32.mrb[0].mxu0
    %v224 = vadd.f32 %v150, %v223
    %v225 = vpop.f32.mrb[0].mxu0
    %226 = vdwg.mxu0
    %v227 = vmax.f32 %v219, 0.0
    %v228 = vmax.f32 %v224, 0.0
    %v229 = vld [vmem:[%s5] sm:$0xff]
    %v230 = vld [vmem:[%s5 + $0x8] sm:$0xff]
    %v231 = vld [vmem:[%s5 + $0x10] sm:$0xff]
    %v232 = vld [vmem:[%s5 + $0x18] sm:$0xff]
    %v233 = vld [vmem:[%s5 + $0x20] sm:$0xff]
    %v234 = vld [vmem:[%s5 + $0x28] sm:$0xff]
    %v235 = vld [vmem:[%s5 + $0x30] sm:$0xff]
    %v236 = vld [vmem:[%s5 + $0x38] sm:$0xff]
    %v237 = vld [vmem:[%s5 + $0x40] sm:$0xff]
    %v238 = vld [vmem:[%s5 + $0x48] sm:$0xff]
    %v239 = vld [vmem:[%s5 + $0x50] sm:$0xff]
    %v240 = vld [vmem:[%s5 + $0x58] sm:$0xff]
    %v241 = vld [vmem:[%s5 + $0x60] sm:$0xff]
    %v242 = vld [vmem:[%s5 + $0x68] sm:$0xff]
    %v243 = vld [vmem:[%s5 + $0x70] sm:$0xff]
    %v244 = vld [vmem:[%s5 + $0x78] sm:$0xff]
    %v245 = vld [vmem:[%s6] sm:$0x1]
    %v247 = vlaneseq
    %v248 = vshrl.u32 %v247, 7
    %v249 = vsub.s32 0, %v248
    %v250 = vrot.slane %v245, %v249
    %252 = vmatprep.subr.mxu0 0.0
    %253 = vmatpush1.msra.mxu0 %v229
    %254 = vmatprep.subr.mxu0 0.0
    %255 = vmatpush1.msra.mxu0 %v230
    %256 = vmatprep.subr.mxu0 0.0
    %257 = vmatpush1.msra.mxu0 %v231
    %258 = vmatprep.subr.mxu0 0.0
    %259 = vmatpush1.msra.mxu0 %v232
    %260 = vmatprep.subr.mxu0 0.0
    %261 = vmatpush1.msra.mxu0 %v233
    %262 = vmatprep.subr.mxu0 0.0
    %263 = vmatpush1.msra.mxu0 %v234
    %264 = vmatprep.subr.mxu0 0.0
    %265 = vmatpush1.msra.mxu0 %v235
    %266 = vmatprep.subr.mxu0 0.0
    %267 = vmatpush1.msra.mxu0 %v236
    %268 = vmatprep.subr.mxu0 0.0
    %269 = vmatpush1.msra.mxu0 %v237
    %270 = vmatprep.subr.mxu0 0.0
    %271 = vmatpush1.msra.mxu0 %v238
    %272 = vmatprep.subr.mxu0 0.0
    %273 = vmatpush1.msra.mxu0 %v239
    %274 = vmatprep.subr.mxu0 0.0
    %275 = vmatpush1.msra.mxu0 %v240
    %276 = vmatprep.subr.mxu0 0.0
    %277 = vmatpush1.msra.mxu0 %v241
    %278 = vmatprep.subr.mxu0 0.0
    %279 = vmatpush1.msra.mxu0 %v242
    %280 = vmatprep.subr.mxu0 0.0
    %281 = vmatpush1.msra.mxu0 %v243
    %282 = vmatprep.subr.mxu0 0.0
    %283 = vmatpush1.msra.mxu0 %v244
    %284 = vmatprep.subr.mxu0 0.0
    %285 = vmatpush1.msra.mxu0 0.0
    %286 = vmatprep.subr.mxu0 0.0
    %287 = vmatpush1.msra.mxu0 0.0
    %288 = vmatprep.subr.mxu0 0.0
    %289 = vmatpush1.msra.mxu0 0.0
    %290 = vmatprep.subr.mxu0 0.0
    %291 = vmatpush1.msra.mxu0 0.0
    %292 = vmatprep.subr.mxu0 0.0
    %293 = vmatpush1.msra.mxu0 0.0
    %294 = vmatprep.subr.mxu0 0.0
    %295 = vmatpush1.msra.mxu0 0.0
    %296 = vmatprep.subr.mxu0 0.0
    %297 = vmatpush1.msra.mxu0 0.0
    %298 = vmatprep.subr.mxu0 0.0
    %299 = vmatpush1.msra.mxu0 0.0
    %300 = vmatprep.subr.mxu0 0.0
    %301 = vmatpush1.msra.mxu0 0.0
    %302 = vmatprep.subr.mxu0 0.0
    %303 = vmatpush1.msra.mxu0 0.0
    %304 = vmatprep.subr.mxu0 0.0
    %305 = vmatpush1.msra.mxu0 0.0
    %306 = vmatprep.subr.mxu0 0.0
    %307 = vmatpush1.msra.mxu0 0.0
    %308 = vmatprep.subr.mxu0 0.0
    %309 = vmatpush1.msra.mxu0 0.0
    %310 = vmatprep.subr.mxu0 0.0
    %311 = vmatpush1.msra.mxu0 0.0
    %312 = vmatprep.subr.mxu0 0.0
    %313 = vmatpush1.msra.mxu0 0.0
    %314 = vmatprep.subr.mxu0 0.0
    %315 = vmatpush1.msra.mxu0 0.0
    %316 = vmatprep.mubr.f32.mxu0 0.0
    %317 = vmatmul.mubr.f32.gmra.mrb[0].mxu0 %v227
    %v318 = vpop.f32.mrb[0].mxu0
    %v319 = vadd.f32 %v250, %v318
    %v320 = vpop.f32.mrb[0].mxu0
    %321 = vmatprep.mubr.f32.mxu0 0.0
    %322 = vmatmul.mubr.f32.gmra.mrb[0].mxu0 %v228
    %v323 = vpop.f32.mrb[0].mxu0
    %v324 = vadd.f32 %v250, %v323
    %v325 = vpop.f32.mrb[0].mxu0
    %326 = vdwg.mxu0
    %327 = vst [vmem:[#allocation2] sm:$0xff] %v319
    %328 = vst [vmem:[#allocation2 + $0x8] sm:$0xff] %v324
    // Predicated region
    $region30: #{state_encoder_forward.1} parent=1 // pred_check
      _
    $region31: #{state_encoder_forward.1} parent=1 // pred_check_branch
      %330 = sbr.rel (0) target = $region33
    $region32: #{state_encoder_forward.1} parent=1 // pred_region
      %s332 = ssub.s32 256, 256
      %333 = vsyncadd [#allocation3], %s332
      %s334 = sshll.u32 [#allocation2], 4
      %s335 = int_to_ptr.vmem [resolvable:$true] %s334
      %340 = dma.vmem_to_hbm [thread:$0]  %s335, 256, %s7, [#allocation3], 128, 128, 8
    $region33: #{state_encoder_forward.1} parent=1 // pred_fallthru
      _
    // Predicated region
    $region34: #{state_encoder_forward.1} parent=1 // pred_check
      _
    $region35: #{state_encoder_forward.1} parent=1 // pred_check_branch
      %342 = sbr.rel (0) target = $region37
    $region36: #{state_encoder_forward.1} parent=1 // pred_region
      %343 = dma.done [#allocation3], 256
    $region37: #{state_encoder_forward.1} parent=1 // pred_fallthru
      _
    %344 = vsyncpa [#allocation3], 1

</llo_original>
